<compile_context>
chip_gen: v5e
topology: v5e:2x2
jax: 0.10.0
libtpu: 0.0.40
codegen_flags: <defaults>
</compile_context>

<pallas_src>
import jax
import jax.numpy as jnp
from jax.experimental import pallas as pl
from jax.experimental.pallas import tpu as pltpu


# ---------------------------------------------------------------------------
# Kernel: works on a (TB, F_in) batch tile with fully-resident weights/biases.
# ---------------------------------------------------------------------------
def _policy_kernel(x_ref, w1_ref, b1_ref, w2_ref, b2_ref, out_ref):
    x = x_ref[...]                                                   # (TB, F_in) f32

    # fc1 + ReLU
    h = jnp.dot(x, w1_ref[...], preferred_element_type=jnp.float32)  # (TB, H)
    h = jnp.maximum(h + b1_ref[...], 0.0)

    # fc2
    logits = jnp.dot(h, w2_ref[...], preferred_element_type=jnp.float32)  # (TB, A)
    logits = logits + b2_ref[...]

    # Softmax over the action (lane) axis, numerically stable.
    # Block == full array along A, so Mosaic masks padded lanes and the
    # reduction over the 2-wide axis is exact.  Exact divide (not approx
    # reciprocal) so results match the f32 reference to tight tolerance.
    m = jnp.max(logits, axis=-1, keepdims=True)
    e = jnp.exp(logits - m)
    denom = jnp.sum(e, axis=-1, keepdims=True)
    out_ref[...] = (e / denom).astype(out_ref.dtype)


# ---------------------------------------------------------------------------
# One-time parameter preparation (hoisted out of the per-call path).
# PyTorch layout (out,in) -> kernel layout (in,out); biases as 2-D row vectors.
# ---------------------------------------------------------------------------
def prepare_policy_params(w1, b1, w2, b2):
    w1_t = jnp.asarray(w1, jnp.float32).T               # (F_in, H)
    b1_r = jnp.asarray(b1, jnp.float32).reshape(1, -1)  # (1, H)
    w2_t = jnp.asarray(w2, jnp.float32).T               # (H, A)
    b2_r = jnp.asarray(b2, jnp.float32).reshape(1, -1)  # (1, A)
    return w1_t, b1_r, w2_t, b2_r


def _cost_estimate(B, F_in, H, A):
    flops = 2 * B * (F_in * H + H * A) + 6 * B * A   # matmuls + softmax elementwise
    transcendentals = B * A                          # exp
    bytes_accessed = 4 * (B * F_in + F_in * H + H + H * A + A + B * A)
    return pl.CostEstimate(flops=flops,
                           transcendentals=transcendentals,
                           bytes_accessed=bytes_accessed)


# ---------------------------------------------------------------------------
# Small-batch path: no grid, full-array VMEM blocks, single kernel invocation.
# ---------------------------------------------------------------------------
def policy_forward(x, params):
    """x: (B, F_in) float32; params from prepare_policy_params."""
    w1_t, b1_r, w2_t, b2_r = params
    B, F_in = x.shape
    H = w1_t.shape[1]
    A = w2_t.shape[1]
    return pl.pallas_call(
        _policy_kernel,
        out_shape=jax.ShapeDtypeStruct((B, A), jnp.float32),
        cost_estimate=_cost_estimate(B, F_in, H, A),
    )(x, w1_t, b1_r, w2_t, b2_r)


# ---------------------------------------------------------------------------
# Batched path: tile the batch, keep weights resident across grid steps,
# mark the batch axis "parallel" so v7x's 2 TensorCores split it.
# ---------------------------------------------------------------------------
def policy_forward_batched(x, params, *, tb=128):
    w1_t, b1_r, w2_t, b2_r = params
    B, F_in = x.shape
    H = w1_t.shape[1]
    A = w2_t.shape[1]
    assert B % tb == 0, "batch must be a multiple of the batch tile"
    return pl.pallas_call(
        _policy_kernel,
        out_shape=jax.ShapeDtypeStruct((B, A), jnp.float32),
        grid=(B // tb,),
        in_specs=[
            pl.BlockSpec((tb, F_in), lambda i: (i, 0)),
            pl.BlockSpec((F_in, H), lambda i: (0, 0)),   # resident across steps
            pl.BlockSpec((1, H), lambda i: (0, 0)),
            pl.BlockSpec((H, A), lambda i: (0, 0)),
            pl.BlockSpec((1, A), lambda i: (0, 0)),
        ],
        out_specs=pl.BlockSpec((tb, A), lambda i: (i, 0)),
        compiler_params=pltpu.CompilerParams(
            dimension_semantics=("parallel",)),
        cost_estimate=_cost_estimate(B, F_in, H, A),
    )(x, w1_t, b1_r, w2_t, b2_r)


# ---------------------------------------------------------------------------
# Deterministic synthetic init mirroring nn.Linear shapes + Policy.add_noise().
# ---------------------------------------------------------------------------
def init_policy_params(key, in_features=4, hidden=4, num_actions=2):
    k1, k2, k3, k4, k5, k6 = jax.random.split(key, 6)
    bound1 = 1.0 / jnp.sqrt(jnp.float32(in_features))
    bound2 = 1.0 / jnp.sqrt(jnp.float32(hidden))
    w1 = jax.random.uniform(k1, (hidden, in_features), jnp.float32, -bound1, bound1)
    b1 = jax.random.uniform(k2, (hidden,), jnp.float32, -bound1, bound1)
    w2 = jax.random.uniform(k3, (num_actions, hidden), jnp.float32, -bound2, bound2)
    b2 = jax.random.uniform(k4, (num_actions,), jnp.float32, -bound2, bound2)
    # add_noise(): N(0, 0.05) added to the weight matrices
    w1 = w1 + 0.05 * jax.random.normal(k5, w1.shape, jnp.float32)
    w2 = w2 + 0.05 * jax.random.normal(k6, w2.shape, jnp.float32)
    return w1, b1, w2, b2


def _reference(x, w1, b1, w2, b2):
    h = jnp.maximum(x @ w1.T + b1, 0.0)
    return jax.nn.softmax(h @ w2.T + b2, axis=1)


if __name__ == "__main__":
    key = jax.random.PRNGKey(0)
    k_x, k_xb, k_p = jax.random.split(key, 3)

    B, F_IN, HID, ACT = 8, 4, 4, 2
    x = jax.random.normal(k_x, (B, F_IN), jnp.float32)
    w1, b1, w2, b2 = init_policy_params(k_p, F_IN, HID, ACT)

    # One-time prep (NOT part of the per-call hot path).
    params = prepare_policy_params(w1, b1, w2, b2)

    # --- small-batch, grid-less path ---
    probs = policy_forward(x, params)
    jax.block_until_ready(probs)
    ref = _reference(x, w1, b1, w2, b2)
    assert probs.shape == (B, ACT)
    assert jnp.allclose(probs, ref, atol=1e-4, rtol=1e-4)
    assert jnp.allclose(jnp.sum(probs, axis=1), 1.0, atol=1e-4)

    # --- batched path (amortized dispatch, parallel batch axis for v7x) ---
    BB = 256
    xb = jax.random.normal(k_xb, (BB, F_IN), jnp.float32)
    probs_b = policy_forward_batched(xb, params, tb=128)
    jax.block_until_ready(probs_b)
    ref_b = _reference(xb, w1, b1, w2, b2)
    assert probs_b.shape == (BB, ACT)
    assert jnp.allclose(probs_b, ref_b, atol=1e-4, rtol=1e-4)
    assert jnp.allclose(jnp.sum(probs_b, axis=1), 1.0, atol=1e-4)

    print("KERNEL_OK")
</pallas_src>

<mosaic_0001>
module attributes {stable_mosaic.version = 11 : i64} {
  func.func @_policy_kernel(%arg0: memref<8x4xf32, #tpu.memory_space<vmem>>, %arg1: memref<4x4xf32, #tpu.memory_space<vmem>>, %arg2: memref<1x4xf32, #tpu.memory_space<vmem>>, %arg3: memref<4x2xf32, #tpu.memory_space<vmem>>, %arg4: memref<1x2xf32, #tpu.memory_space<vmem>>, %arg5: memref<8x2xf32, #tpu.memory_space<vmem>>) attributes {dimension_semantics = [], scalar_prefetch = 0 : i64, scratch_operands = 0 : i64, tpu.core_type = #tpu.core_type<tc>} {
    %c0 = arith.constant 0 : index
    %c0_0 = arith.constant 0 : index
    %0 = vector.load %arg0[%c0, %c0_0] : memref<8x4xf32, #tpu.memory_space<vmem>>, vector<8x4xf32>
    %c0_1 = arith.constant 0 : index
    %c0_2 = arith.constant 0 : index
    %1 = vector.load %arg1[%c0_1, %c0_2] : memref<4x4xf32, #tpu.memory_space<vmem>>, vector<4x4xf32>
    %cst = arith.constant dense<0.000000e+00> : vector<8x4xf32>
    %2 = tpu.matmul %0, %1, %cst {dimension_numbers = #tpu.dot_dimension_numbers<[1], [0], [0], [1], [0, 0, 1, 1], [], []>} : vector<8x4xf32>, vector<4x4xf32>, vector<8x4xf32> -> vector<8x4xf32>
    %c0_3 = arith.constant 0 : index
    %c0_4 = arith.constant 0 : index
    %3 = vector.load %arg2[%c0_3, %c0_4] : memref<1x4xf32, #tpu.memory_space<vmem>>, vector<1x4xf32>
    %4 = vector.broadcast %3 : vector<1x4xf32> to vector<8x4xf32>
    %5 = arith.addf %2, %4 : vector<8x4xf32>
    %cst_5 = arith.constant 0.000000e+00 : f32
    %6 = vector.broadcast %cst_5 : f32 to vector<8x4xf32>
    %7 = arith.maximumf %5, %6 : vector<8x4xf32>
    %c0_6 = arith.constant 0 : index
    %c0_7 = arith.constant 0 : index
    %8 = vector.load %arg3[%c0_6, %c0_7] : memref<4x2xf32, #tpu.memory_space<vmem>>, vector<4x2xf32>
    %cst_8 = arith.constant dense<0.000000e+00> : vector<8x2xf32>
    %9 = tpu.matmul %7, %8, %cst_8 {dimension_numbers = #tpu.dot_dimension_numbers<[1], [0], [0], [1], [0, 0, 1, 1], [], []>} : vector<8x4xf32>, vector<4x2xf32>, vector<8x2xf32> -> vector<8x2xf32>
    %c0_9 = arith.constant 0 : index
    %c0_10 = arith.constant 0 : index
    %10 = vector.load %arg4[%c0_9, %c0_10] : memref<1x2xf32, #tpu.memory_space<vmem>>, vector<1x2xf32>
    %11 = vector.broadcast %10 : vector<1x2xf32> to vector<8x2xf32>
    %12 = arith.addf %9, %11 : vector<8x2xf32>
    %cst_11 = arith.constant dense<0xFF800000> : vector<8xf32>
    %13 = vector.multi_reduction <maximumf>, %12, %cst_11 [1] : vector<8x2xf32> to vector<8xf32>
    %14 = vector.shape_cast %13 : vector<8xf32> to vector<8x1xf32>
    %15 = vector.broadcast %14 : vector<8x1xf32> to vector<8x2xf32>
    %16 = arith.subf %12, %15 : vector<8x2xf32>
    %17 = math.exp %16 : vector<8x2xf32>
    %cst_12 = arith.constant dense<0.000000e+00> : vector<8xf32>
    %18 = vector.multi_reduction <add>, %17, %cst_12 [1] : vector<8x2xf32> to vector<8xf32>
    %19 = vector.shape_cast %18 : vector<8xf32> to vector<8x1xf32>
    %20 = vector.broadcast %19 : vector<8x1xf32> to vector<8x2xf32>
    %21 = arith.divf %17, %20 : vector<8x2xf32>
    %c0_13 = arith.constant 0 : index
    %c0_14 = arith.constant 0 : index
    %22 = vector.load %arg5[%c0_13, %c0_14] : memref<8x2xf32, #tpu.memory_space<vmem>>, vector<8x2xf32>
    tpu.vector_store %arg5[%c0_13, %c0_14], %21 {strides = array<i32>} : memref<8x2xf32, #tpu.memory_space<vmem>>, vector<8x2xf32>,
    return
  }
}

</mosaic_0001>

<llo_original>
// kernel: tpu_custom_call.1
$region0: #{tpu_custom_call.1}
  #allocation0 [shape = 'u32[]', space=smem, size = 0x4, offset = 0x4, fixed_abs, tag = 'smem constant byte address 0x4 - core index']
  #allocation1 [shape = 'u32[72,128]{1,0:T(1,128)}', space=vmem, size = 0x9000, scoped, tag = 'internal scratch']
  %s0 = inlined_call_operand.vmem [shape: f32[8,4], index: 0, kind: input, shape index: {}]
  %s1 = inlined_call_operand.vmem [shape: f32[4,4], index: 1, kind: input, shape index: {}]
  %s2 = inlined_call_operand.vmem [shape: f32[1,4], index: 2, kind: input, shape index: {}]
  %s3 = inlined_call_operand.vmem [shape: f32[4,2], index: 3, kind: input, shape index: {}]
  %s4 = inlined_call_operand.vmem [shape: f32[1,2], index: 4, kind: input, shape index: {}]
  %s5 = inlined_call_operand.vmem [shape: f32[8,2], index: 5, kind: output, shape index: {}]
  %s6 = sld [smem:[#allocation0]]
  $region30: #{tpu_custom_call.1} parent=0
    _
  %s8 = ssub.s32 1, %s6
  %s9 = scalar_select 0, %s8, %s6
  // Predicated region
  $region2: #{tpu_custom_call.1} parent=0 // pred_check
    _
  $region3: #{tpu_custom_call.1} parent=0 // pred_check_branch
    %11 = sbr.rel (0) target = $region5
  $region4: #{tpu_custom_call.1} parent=0 // pred_region
    _
  $region5: #{tpu_custom_call.1} parent=0 // pred_fallthru
    _
  // Predicated region
  $region6: #{tpu_custom_call.1} parent=0 // pred_check
    _
  $region7: #{tpu_custom_call.1} parent=0 // pred_check_branch
    %13 = sbr.rel (0) target = $region9
  $region8: #{tpu_custom_call.1} parent=0 // pred_region
    _
  $region9: #{tpu_custom_call.1} parent=0 // pred_fallthru
    _
  // Predicated region
  $region10: #{tpu_custom_call.1} parent=0 // pred_check
    _
  $region11: #{tpu_custom_call.1} parent=0 // pred_check_branch
    %15 = sbr.rel (0) target = $region13
  $region12: #{tpu_custom_call.1} parent=0 // pred_region
    _
  $region13: #{tpu_custom_call.1} parent=0 // pred_fallthru
    _
  // Predicated region
  $region14: #{tpu_custom_call.1} parent=0 // pred_check
    _
  $region15: #{tpu_custom_call.1} parent=0 // pred_check_branch
    %17 = sbr.rel (0) target = $region17
  $region16: #{tpu_custom_call.1} parent=0 // pred_region
    _
  $region17: #{tpu_custom_call.1} parent=0 // pred_fallthru
    _
  // Predicated region
  $region18: #{tpu_custom_call.1} parent=0 // pred_check
    _
  $region19: #{tpu_custom_call.1} parent=0 // pred_check_branch
    %19 = sbr.rel (0) target = $region21
  $region20: #{tpu_custom_call.1} parent=0 // pred_region
    _
  $region21: #{tpu_custom_call.1} parent=0 // pred_fallthru
    _
  %v20 = vld [vmem:[%s0] sm:$0xff]
  %v21 = vld [vmem:[%s1] sm:$0xf]
  %v22 = vld [vmem:[%s2] sm:$0x1]
  %v24 = vperm.slane %v22, 0
  %vm26 = vcmask 31744
  %v28 = vsel %vm26, %v20, 0
  %vm30 = vcmask 1043456
  %v32 = vsel %vm30, %v21, 0
  %34 = vmatpush.msra.mxu0 0.0
  %35 = vmatpush.msra.mxu0 0.0
  %36 = vmatpush.msra.mxu0 0.0
  %37 = vmatpush.msra.mxu0 0.0
  %38 = vmatpush.msra.mxu0 0.0
  %39 = vmatpush.msra.mxu0 0.0
  %40 = vmatpush.msra.mxu0 0.0
  %41 = vmatpush.msra.mxu0 0.0
  %42 = vmatpush.msra.mxu0 0.0
  %43 = vmatpush.msra.mxu0 0.0
  %44 = vmatpush.msra.mxu0 0.0
  %45 = vmatpush.msra.mxu0 0.0
  %46 = vmatpush.msra.mxu0 0.0
  %47 = vmatpush.msra.mxu0 0.0
  %48 = vmatpush.msra.mxu0 0.0
  %49 = vmatpush.msra.mxu0 %v32
  %50 = vmatmul.f32.gmra.mxu0 %v28
  %v51 = vpop.f32.mrf.mxu0
  %v52 = vadd.f32 %v24, %v51
  %53 = vdwg.mxu0
  %v54 = vmax.f32 %v52, 0.0
  %v55 = vld [vmem:[%s3] sm:$0xf]
  %v56 = vld [vmem:[%s4] sm:$0x1]
  %v58 = vperm.slane %v56, 0
  %v61 = vsel %vm26, %v54, 0
  %v64 = vsel %vm30, %v55, 0
  %66 = vmatpush.msra.mxu0 0.0
  %67 = vmatpush.msra.mxu0 0.0
  %68 = vmatpush.msra.mxu0 0.0
  %69 = vmatpush.msra.mxu0 0.0
  %70 = vmatpush.msra.mxu0 0.0
  %71 = vmatpush.msra.mxu0 0.0
  %72 = vmatpush.msra.mxu0 0.0
  %73 = vmatpush.msra.mxu0 0.0
  %74 = vmatpush.msra.mxu0 0.0
  %75 = vmatpush.msra.mxu0 0.0
  %76 = vmatpush.msra.mxu0 0.0
  %77 = vmatpush.msra.mxu0 0.0
  %78 = vmatpush.msra.mxu0 0.0
  %79 = vmatpush.msra.mxu0 0.0
  %80 = vmatpush.msra.mxu0 0.0
  %81 = vmatpush.msra.mxu0 %v64
  %82 = vmatmul.f32.gmra.mxu0 %v61
  %v83 = vpop.f32.mrf.mxu0
  %v84 = vadd.f32 %v58, %v83
  %85 = vdwg.mxu0
  %vm86 = vcmask 15360
  %v87 = vsel %vm86, %v84, -inf
  %88 = vmax.xlane.f32.xlu0 %v87
  %v89 = vpop.xlane.xlu0 %88
  %v90 = vsub.f32 %v84, %v89
  %v91 = vmul.f32 %v90, 1.442695
  %v92 = vpow.pop %v91
  %v93 = vsel %vm86, %v92, 0.0
  %94 = vadd.xlane.f32.xlu0 %v93
  %v95 = vpop.xlane.xlu0 %94
  %v96 = vrcp.pop %v95
  %v97 = vmul.f32 %v95, %v96
  %v98 = vsub.f32 1.0, %v97
  %v99 = vmul.f32 %v96, %v98
  %v100 = vadd.f32 %v96, %v99
  %vm101 = vweird.f32 %v95
  %vm102 = vweird.f32 %v96
  %vm103 = vmor %vm101, %vm102
  %v104 = vsel %vm103, %v96, %v100
  %v105 = vand.u32 2147483647, %v95
  %vm106 = vcmp.eq.f32.partialorder %v105, 8.507059e+37
  %v107 = vand.u32 %v95, 2147483648
  %v108 = vor.u32 1.1754944e-38, %v107
  %v109 = vsel %vm106, %v108, %v104
  %v110 = vmul.f32 %v92, %v109
  %111 = vst.msk [vmem:[%s5] sm:$0xff] %vm86, %v110
  // Predicated region
  $region22: #{tpu_custom_call.1} parent=0 // pred_check
    _
  $region23: #{tpu_custom_call.1} parent=0 // pred_check_branch
    %113 = sbr.rel (0) target = $region25
  $region24: #{tpu_custom_call.1} parent=0 // pred_region
    _
  $region25: #{tpu_custom_call.1} parent=0 // pred_fallthru
    _
  // Predicated region
  $region26: #{tpu_custom_call.1} parent=0 // pred_check
    _
  $region27: #{tpu_custom_call.1} parent=0 // pred_check_branch
    %115 = sbr.rel (0) target = $region29
  $region28: #{tpu_custom_call.1} parent=0 // pred_region
    _
  $region29: #{tpu_custom_call.1} parent=0 // pred_fallthru
    _

</llo_original>
